<compile_context>
chip_gen: v7x
topology: tpu7x:2x2x1
jax: 0.10.0
libtpu: 0.0.40
codegen_flags: <defaults>
</compile_context>

<pallas_src>
import jax
import jax.numpy as jnp
from jax.experimental import pallas as pl
from jax.experimental.pallas import tpu as pltpu


_LANE = 128   # vreg lane width  (last dim)
_SUB = 8      # vreg sublane width (second-to-last dim)


def _round_up(n: int, m: int) -> int:
    return ((n + m - 1) // m) * m


# --------------------------------------------------------------------------
# Hardware introspection (generation-aware VMEM budget / TensorCore count)
# --------------------------------------------------------------------------
def _tpu_generation_info():
    try:
        kind = jax.devices()[0].device_kind.lower()
    except Exception:  # pragma: no cover
        kind = ""
    is_v7 = "v7" in kind
    try:
        vmem_cap = int(pltpu.get_tpu_info().vmem_capacity_bytes)
    except Exception:
        vmem_cap = (64 << 20) if is_v7 else (128 << 20)
    num_tc = 2 if is_v7 else 1   # v7x has 2 TensorCores per chip
    return vmem_cap, num_tc


# --------------------------------------------------------------------------
# One-time parameter preparation (hoisted out of the per-call path)
# --------------------------------------------------------------------------
def prepare_mlp_params(weights, biases):
    """Pad every feature dim to a multiple of 128 and cast weights to bf16.

    Call once (e.g. at init / after each optimizer step) and reuse the result
    across forward calls -- avoids a per-call pad/cast HBM round trip.
    weights[i]: (in_i, out_i)  (transposed vs PyTorch nn.Linear), biases[i]: (out_i,)
    """
    num_layers = len(weights)
    dims = [weights[0].shape[0]] + [w.shape[1] for w in weights]
    dims_p = [_round_up(d, _LANE) for d in dims]

    w_pads, b_pads = [], []
    for li in range(num_layers):
        w = jnp.asarray(weights[li], jnp.float32)
        b = jnp.asarray(biases[li], jnp.float32)
        wp = jnp.pad(w, ((0, dims_p[li] - w.shape[0]),
                         (0, dims_p[li + 1] - w.shape[1])))
        bp = jnp.pad(b.reshape(1, -1),
                     ((0, 0), (0, dims_p[li + 1] - b.shape[0])))
        w_pads.append(wp.astype(jnp.bfloat16))   # bf16 weights: half the DMA
        b_pads.append(bp)                        # f32 bias
    return {
        "weights": tuple(w_pads),
        "biases": tuple(b_pads),
        "dims": tuple(dims),
        "dims_p": tuple(dims_p),
    }


# --------------------------------------------------------------------------
# Kernels
# --------------------------------------------------------------------------
def _make_mlp_kernel(num_layers: int, activate_final: bool):
    """Fully fused kernel: all weights resident in VMEM, x streamed in blocks."""

    def kernel(x_ref, *refs):
        # refs layout: w_0, b_0, w_1, b_1, ..., w_{L-1}, b_{L-1}, out_ref
        out_ref = refs[-1]
        h = x_ref[...]                                 # bf16 block, no cast
        for i in range(num_layers):
            w = refs[2 * i][...]                       # bf16 (in_p, out_p)
            b = refs[2 * i + 1][...]                   # f32  (1, out_p)
            # bf16 x bf16 matmul on the MXU, f32 accumulation + bias.
            h = jnp.dot(h, w, preferred_element_type=jnp.float32) + b
            if i < num_layers - 1 or activate_final:
                h = jnp.maximum(h, 0.0)                # activation_fn = F.relu
            if i < num_layers - 1:
                h = h.astype(jnp.bfloat16)             # next MXU operand
        out_ref[...] = h.astype(out_ref.dtype)

    return kernel


def _make_linear_kernel(relu: bool):
    """Single Linear (+ optional ReLU) for the per-layer streamed fallback."""

    def kernel(x_ref, w_ref, b_ref, o_ref):
        acc = jnp.dot(x_ref[...], w_ref[...],
                      preferred_element_type=jnp.float32) + b_ref[...]
        if relu:
            acc = jnp.maximum(acc, 0.0)
        o_ref[...] = acc.astype(o_ref.dtype)

    return kernel


# --------------------------------------------------------------------------
# VMEM estimates / block_m selection
# --------------------------------------------------------------------------
def _fused_vmem_bytes(block_m, dims_p, resident_bytes, out_itemsize):
    in_blk = 2 * 2 * block_m * dims_p[0]                  # bf16 x, double-buffered
    out_blk = 2 * out_itemsize * block_m * dims_p[-1]     # out, double-buffered
    max_d = max(dims_p)
    # f32 accumulator + bf16 cast temp + next f32 dot output can be live
    # simultaneously in the unrolled layer loop -> count all three.
    inter = block_m * max_d * (4 + 2 + 4)
    return resident_bytes + in_blk + out_blk + inter


def _choose_block_m(batch, dims_p, resident_bytes, out_itemsize, budget, num_tc):
    batch_8 = _round_up(batch, _SUB)
    candidates = {min(c, batch_8) for c in (1024, 512, 256, 128, 64, 32, 16, 8)}
    # v7x: make sure the "parallel" batch axis spans both TensorCores.
    if num_tc > 1 and batch_8 >= num_tc * _SUB:
        cap = _round_up(pl.cdiv(batch_8, num_tc), _SUB)
        candidates = {min(c, cap) for c in candidates}
    for bm in sorted(candidates, reverse=True):
        if _fused_vmem_bytes(bm, dims_p, resident_bytes, out_itemsize) <= budget:
            return bm
    return None   # fused (weights-resident) path does not fit -> stream per layer


# --------------------------------------------------------------------------
# Forward paths
# --------------------------------------------------------------------------
def _linear_layer_pallas(x_p, w_p, b_p, *, relu, block_m, block_n, out_dtype,
                         vmem_limit):
    m_p, k_p = x_p.shape
    n_p = w_p.shape[1]
    grid = (m_p // block_m, n_p // block_n)
    return pl.pallas_call(
        _make_linear_kernel(relu),
        out_shape=jax.ShapeDtypeStruct((m_p, n_p), out_dtype),
        grid_spec=pltpu.PrefetchScalarGridSpec(
            num_scalar_prefetch=0,
            grid=grid,
            in_specs=[pl.BlockSpec((block_m, k_p), lambda i, j: (i, 0)),
                      pl.BlockSpec((k_p, block_n), lambda i, j: (0, j)),
                      pl.BlockSpec((1, block_n), lambda i, j: (0, j))],
            out_specs=pl.BlockSpec((block_m, block_n), lambda i, j: (i, j)),
        ),
        compiler_params=pltpu.CompilerParams(
            dimension_semantics=("parallel", "parallel"),
            vmem_limit_bytes=vmem_limit,
        ),
    )(x_p, w_p, b_p)


def _mlp_per_layer(x, params, activate_final, out_dtype, budget, num_tc):
    """Fallback: weights too big to keep resident -> stream per layer, N-tiled."""
    dims, dims_p = params["dims"], params["dims_p"]
    num_layers = len(params["weights"])
    batch, input_dim = x.shape

    batch_8 = _round_up(batch, _SUB)
    block_m = min(batch_8, 512)
    if num_tc > 1 and batch_8 >= num_tc * _SUB:
        block_m = min(block_m, _round_up(pl.cdiv(batch_8, num_tc), _SUB))
    batch_p = _round_up(batch, block_m)

    h = jnp.pad(x, ((0, batch_p - batch),
                    (0, dims_p[0] - input_dim))).astype(jnp.bfloat16)

    for li in range(num_layers):
        w_p, b_p = params["weights"][li], params["biases"][li]
        k_p, n_p = w_p.shape
        last = (li == num_layers - 1)
        relu = (not last) or activate_final
        # Widest N tile whose working set fits the VMEM budget.
        block_n = _LANE
        for cand in (2048, 1024, 512, 256, 128):
            if n_p % cand == 0:
                est = (2 * 2 * block_m * k_p        # bf16 x block, dbl-buffered
                       + 2 * 2 * k_p * cand         # bf16 w tile, dbl-buffered
                       + 2 * 4 * block_m * cand     # out block, dbl-buffered
                       + 4 * block_m * cand)        # f32 accumulator
                if est <= budget:
                    block_n = cand
                    break
        # TODO(synk): add K-tiling (grid over the contraction dim + accumulator
        # scratch) for layers whose (K_p x block_n) weight tile still exceeds VMEM.
        layer_dtype = out_dtype if last else jnp.bfloat16
        h = _linear_layer_pallas(h, w_p, b_p, relu=relu, block_m=block_m,
                                 block_n=block_n, out_dtype=layer_dtype,
                                 vmem_limit=budget)
    return h[:batch, :dims[-1]]


def mlp_forward_pallas(x, params, *, activate_final=False,
                       out_dtype=jnp.float32, force_per_layer=False):
    """MLP forward using pre-prepared (padded, bf16) params.

    x: (batch, input_dim) float32. Returns (batch, out_dim) `out_dtype`.
    """
    dims, dims_p = params["dims"], params["dims_p"]
    num_layers = len(params["weights"])
    batch, input_dim = x.shape
    assert input_dim == dims[0], "x feature dim does not match params"
    out_dim = dims[-1]
    out_itemsize = jnp.dtype(out_dtype).itemsize

    vmem_cap, num_tc = _tpu_generation_info()
    budget = int(vmem_cap * 0.85)          # ~15% headroom off physical VMEM

    resident_bytes = sum(int(a.size) * a.dtype.itemsize
                         for a in params["weights"] + params["biases"])

    block_m = None if force_per_layer else _choose_block_m(
        batch, dims_p, resident_bytes, out_itemsize, budget, num_tc)

    if block_m is None:
        # Resident-weight fusion does not fit (e.g. wide MLP on v7x's 64 MiB).
        return _mlp_per_layer(x, params, activate_final, out_dtype, budget, num_tc)

    batch_p = _round_up(batch, block_m)
    grid_m = batch_p // block_m

    # bf16 input blocks: half the per-step DMA bytes, no in-kernel cast.
    x_p = jnp.pad(x, ((0, batch_p - batch),
                      (0, dims_p[0] - input_dim))).astype(jnp.bfloat16)

    operands = []
    in_specs = [pl.BlockSpec((block_m, dims_p[0]), lambda i: (i, 0))]
    for li in range(num_layers):
        operands.append(params["weights"][li])
        operands.append(params["biases"][li])
        # Grid-invariant operands: whole array mapped into VMEM (single copy,
        # not pipelined / double-buffered), no per-step DMA.
        in_specs.append(pl.BlockSpec(memory_space=pltpu.MemorySpace.VMEM))
        in_specs.append(pl.BlockSpec(memory_space=pltpu.MemorySpace.VMEM))

    est = _fused_vmem_bytes(block_m, dims_p, resident_bytes, out_itemsize)
    vmem_limit = min(budget, max(32 << 20, int(est * 1.3)))

    flops = 2 * batch_p * sum(a * b for a, b in zip(dims_p[:-1], dims_p[1:]))
    bytes_accessed = x_p.size * 2 + resident_bytes + batch_p * dims_p[-1] * out_itemsize
    cost = pl.CostEstimate(flops=flops, transcendentals=0,
                           bytes_accessed=bytes_accessed)

    out_p = pl.pallas_call(
        _make_mlp_kernel(num_layers, activate_final),
        out_shape=jax.ShapeDtypeStruct((batch_p, dims_p[-1]), out_dtype),
        grid_spec=pltpu.PrefetchScalarGridSpec(
            num_scalar_prefetch=0,
            grid=(grid_m,),
            in_specs=in_specs,
            out_specs=pl.BlockSpec((block_m, dims_p[-1]), lambda i: (i, 0)),
        ),
        compiler_params=pltpu.CompilerParams(
            dimension_semantics=("parallel",),
            vmem_limit_bytes=vmem_limit,
        ),
        cost_estimate=cost,
    )(x_p, *operands)

    return out_p[:batch, :out_dim]


# Convenience one-shot API (prepares params every call; prefer caching).
def mlp_pallas(x, weights, biases, *, activate_final=False, out_dtype=jnp.float32):
    params = prepare_mlp_params(weights, biases)
    return mlp_forward_pallas(x, params, activate_final=activate_final,
                              out_dtype=out_dtype)


# --------------------------------------------------------------------------
# Init + reference
# --------------------------------------------------------------------------
def init_mlp_params(key, input_dim, layer_widths):
    """Deterministic init mimicking torch.nn.Linear's default uniform init."""
    weights, biases = [], []
    prev = input_dim
    for width in layer_widths:
        key, kw, kb = jax.random.split(key, 3)
        bound = 1.0 / jnp.sqrt(prev)
        # Stored as (in, out) — transposed relative to PyTorch's (out, in).
        w = jax.random.uniform(kw, (prev, width), jnp.float32, -bound, bound)
        b = jax.random.uniform(kb, (width,), jnp.float32, -bound, bound)
        weights.append(w)
        biases.append(b)
        prev = width
    return weights, biases


def mlp_reference(x, weights, biases, activate_final=False):
    """Pure-JAX f32 reference matching the PyTorch MLP.forward semantics."""
    h = x
    n = len(weights)
    for i in range(n):
        h = h @ weights[i] + biases[i]
        if i < n - 1 or activate_final:
            h = jax.nn.relu(h)
    return h


if __name__ == "__main__":
    # Small, deterministic example shapes consistent with the module:
    #   input_dim = 16, layer_widths = [32, 32, 8], batch = 16
    key = jax.random.PRNGKey(0)
    key, kx = jax.random.split(key)

    batch = 16
    input_dim = 16
    layer_widths = [32, 32, 8]
    activate_final = False  # PyTorch default

    x = jax.random.normal(kx, (batch, input_dim), jnp.float32)
    weights, biases = init_mlp_params(key, input_dim, layer_widths)

    # Pad + bf16-cast the parameters ONCE, reuse across calls.
    params = prepare_mlp_params(weights, biases)

    fwd = jax.jit(lambda xx: mlp_forward_pallas(
        xx, params, activate_final=activate_final))
    out = jax.block_until_ready(fwd(x))

    ref = mlp_reference(x, weights, biases, activate_final=activate_final)
    assert out.shape == (batch, layer_widths[-1])
    # Tolerance loosened vs f32 reference because matmul operands are bf16.
    assert jnp.allclose(out, ref, atol=5e-2, rtol=5e-2), "fused mismatch vs reference"

    # Also exercise the streamed per-layer fallback path (used when resident
    # weights would not fit VMEM, e.g. wide MLPs on v7x).
    out_pl = jax.block_until_ready(mlp_forward_pallas(
        x, params, activate_final=activate_final, force_per_layer=True))
    assert out_pl.shape == (batch, layer_widths[-1])
    assert jnp.allclose(out_pl, ref, atol=5e-2, rtol=5e-2), "fallback mismatch vs reference"

    print("KERNEL_OK")
</pallas_src>

<mosaic_0001>
module attributes {stable_mosaic.version = 11 : i64} {
  func.func @kernel(%arg0: i32, %arg1: memref<16x128xbf16, #tpu.memory_space<vmem>>, %arg2: memref<128x128xbf16, #tpu.memory_space<vmem>>, %arg3: memref<1x128xf32, #tpu.memory_space<vmem>>, %arg4: memref<128x128xbf16, #tpu.memory_space<vmem>>, %arg5: memref<1x128xf32, #tpu.memory_space<vmem>>, %arg6: memref<128x128xbf16, #tpu.memory_space<vmem>>, %arg7: memref<1x128xf32, #tpu.memory_space<vmem>>, %arg8: memref<16x128xf32, #tpu.memory_space<vmem>>) attributes {dimension_semantics = [#tpu.dimension_semantics<parallel>], iteration_bounds = array<i64: 1>, scalar_prefetch = 0 : i64, scratch_operands = 0 : i64, tpu.core_type = #tpu.core_type<tc>, window_params = [{transform_indices = @transform_0, window_bounds = array<i64: 16, 128>}, {pipeline_mode = #tpu.pipeline_mode<synchronous>, transform_indices = @transform_1, window_bounds = array<i64: 128, 128>}, {pipeline_mode = #tpu.pipeline_mode<synchronous>, transform_indices = @transform_2, window_bounds = array<i64: 1, 128>}, {pipeline_mode = #tpu.pipeline_mode<synchronous>, transform_indices = @transform_3, window_bounds = array<i64: 128, 128>}, {pipeline_mode = #tpu.pipeline_mode<synchronous>, transform_indices = @transform_4, window_bounds = array<i64: 1, 128>}, {pipeline_mode = #tpu.pipeline_mode<synchronous>, transform_indices = @transform_5, window_bounds = array<i64: 128, 128>}, {pipeline_mode = #tpu.pipeline_mode<synchronous>, transform_indices = @transform_6, window_bounds = array<i64: 1, 128>}, {transform_indices = @transform_7, window_bounds = array<i64: 16, 128>}]} {
    %c0 = arith.constant 0 : index
    %c0_0 = arith.constant 0 : index
    %0 = vector.load %arg1[%c0, %c0_0] : memref<16x128xbf16, #tpu.memory_space<vmem>>, vector<16x128xbf16>
    %c0_1 = arith.constant 0 : index
    %c0_2 = arith.constant 0 : index
    %1 = vector.load %arg2[%c0_1, %c0_2] : memref<128x128xbf16, #tpu.memory_space<vmem>>, vector<128x128xbf16>
    %c0_3 = arith.constant 0 : index
    %c0_4 = arith.constant 0 : index
    %2 = vector.load %arg3[%c0_3, %c0_4] : memref<1x128xf32, #tpu.memory_space<vmem>>, vector<1x128xf32>
    %cst = arith.constant dense<0.000000e+00> : vector<16x128xf32>
    %3 = tpu.matmul %0, %1, %cst {dimension_numbers = #tpu.dot_dimension_numbers<[1], [0], [0], [1], [0, 0, 1, 1], [], []>} : vector<16x128xbf16>, vector<128x128xbf16>, vector<16x128xf32> -> vector<16x128xf32>
    %4 = vector.broadcast %2 : vector<1x128xf32> to vector<16x128xf32>
    %5 = arith.addf %3, %4 : vector<16x128xf32>
    %cst_5 = arith.constant 0.000000e+00 : f32
    %6 = vector.broadcast %cst_5 : f32 to vector<16x128xf32>
    %7 = arith.maximumf %5, %6 : vector<16x128xf32>
    %8 = arith.truncf %7 : vector<16x128xf32> to vector<16x128xbf16>
    %c0_6 = arith.constant 0 : index
    %c0_7 = arith.constant 0 : index
    %9 = vector.load %arg4[%c0_6, %c0_7] : memref<128x128xbf16, #tpu.memory_space<vmem>>, vector<128x128xbf16>
    %c0_8 = arith.constant 0 : index
    %c0_9 = arith.constant 0 : index
    %10 = vector.load %arg5[%c0_8, %c0_9] : memref<1x128xf32, #tpu.memory_space<vmem>>, vector<1x128xf32>
    %cst_10 = arith.constant dense<0.000000e+00> : vector<16x128xf32>
    %11 = tpu.matmul %8, %9, %cst_10 {dimension_numbers = #tpu.dot_dimension_numbers<[1], [0], [0], [1], [0, 0, 1, 1], [], []>} : vector<16x128xbf16>, vector<128x128xbf16>, vector<16x128xf32> -> vector<16x128xf32>
    %12 = vector.broadcast %10 : vector<1x128xf32> to vector<16x128xf32>
    %13 = arith.addf %11, %12 : vector<16x128xf32>
    %cst_11 = arith.constant 0.000000e+00 : f32
    %14 = vector.broadcast %cst_11 : f32 to vector<16x128xf32>
    %15 = arith.maximumf %13, %14 : vector<16x128xf32>
    %16 = arith.truncf %15 : vector<16x128xf32> to vector<16x128xbf16>
    %c0_12 = arith.constant 0 : index
    %c0_13 = arith.constant 0 : index
    %17 = vector.load %arg6[%c0_12, %c0_13] : memref<128x128xbf16, #tpu.memory_space<vmem>>, vector<128x128xbf16>
    %c0_14 = arith.constant 0 : index
    %c0_15 = arith.constant 0 : index
    %18 = vector.load %arg7[%c0_14, %c0_15] : memref<1x128xf32, #tpu.memory_space<vmem>>, vector<1x128xf32>
    %cst_16 = arith.constant dense<0.000000e+00> : vector<16x128xf32>
    %19 = tpu.matmul %16, %17, %cst_16 {dimension_numbers = #tpu.dot_dimension_numbers<[1], [0], [0], [1], [0, 0, 1, 1], [], []>} : vector<16x128xbf16>, vector<128x128xbf16>, vector<16x128xf32> -> vector<16x128xf32>
    %20 = vector.broadcast %18 : vector<1x128xf32> to vector<16x128xf32>
    %21 = arith.addf %19, %20 : vector<16x128xf32>
    %c0_17 = arith.constant 0 : index
    %c0_18 = arith.constant 0 : index
    %22 = vector.load %arg8[%c0_17, %c0_18] : memref<16x128xf32, #tpu.memory_space<vmem>>, vector<16x128xf32>
    tpu.vector_store %arg8[%c0_17, %c0_18], %21 {strides = array<i32>} : memref<16x128xf32, #tpu.memory_space<vmem>>, vector<16x128xf32>,
    return
  }
  func.func @transform_0(%arg0: i32) -> (i32, i32) {
    %c0_i32 = arith.constant 0 : i32
    %c0_i32_0 = arith.constant 0 : i32
    return %arg0, %c0_i32 : i32, i32
  }
  func.func @transform_1(%arg0: i32) -> (i32, i32) {
    %c0_i32 = arith.constant 0 : i32
    %c0_i32_0 = arith.constant 0 : i32
    %c0_i32_1 = arith.constant 0 : i32
    return %c0_i32, %c0_i32_0 : i32, i32
  }
  func.func @transform_2(%arg0: i32) -> (i32, i32) {
    %c0_i32 = arith.constant 0 : i32
    %c0_i32_0 = arith.constant 0 : i32
    %c0_i32_1 = arith.constant 0 : i32
    return %c0_i32, %c0_i32_0 : i32, i32
  }
  func.func @transform_3(%arg0: i32) -> (i32, i32) {
    %c0_i32 = arith.constant 0 : i32
    %c0_i32_0 = arith.constant 0 : i32
    %c0_i32_1 = arith.constant 0 : i32
    return %c0_i32, %c0_i32_0 : i32, i32
  }
  func.func @transform_4(%arg0: i32) -> (i32, i32) {
    %c0_i32 = arith.constant 0 : i32
    %c0_i32_0 = arith.constant 0 : i32
    %c0_i32_1 = arith.constant 0 : i32
    return %c0_i32, %c0_i32_0 : i32, i32
  }
  func.func @transform_5(%arg0: i32) -> (i32, i32) {
    %c0_i32 = arith.constant 0 : i32
    %c0_i32_0 = arith.constant 0 : i32
    %c0_i32_1 = arith.constant 0 : i32
    return %c0_i32, %c0_i32_0 : i32, i32
  }
  func.func @transform_6(%arg0: i32) -> (i32, i32) {
    %c0_i32 = arith.constant 0 : i32
    %c0_i32_0 = arith.constant 0 : i32
    %c0_i32_1 = arith.constant 0 : i32
    return %c0_i32, %c0_i32_0 : i32, i32
  }
  func.func @transform_7(%arg0: i32) -> (i32, i32) {
    %c0_i32 = arith.constant 0 : i32
    %c0_i32_0 = arith.constant 0 : i32
    return %arg0, %c0_i32 : i32, i32
  }
}

</mosaic_0001>

<llo_original>
// kernel: _lambda_.1
$region0: #{_lambda_.1}
  #allocation0 [shape = 'u32[]', space=smem, size = 0x4, offset = 0x4, fixed_abs, tag = 'smem constant byte address 0x4 - core index']
  #allocation1 [shape = 'u32[144,128]{1,0:T(1,128)}', space=vmem, size = 0x12000, scoped, tag = 'internal scratch']
  %s0 = inlined_call_operand.vmem [shape: bf16[16,128], index: 0, kind: input, shape index: {}]
  %s1 = inlined_call_operand.hbm [shape: bf16[128,128], index: 1, kind: input, shape index: {}]
  %s2 = inlined_call_operand.vmem [shape: f32[1,128], index: 2, kind: input, shape index: {}]
  %s3 = inlined_call_operand.hbm [shape: bf16[128,128], index: 3, kind: input, shape index: {}]
  %s4 = inlined_call_operand.vmem [shape: f32[1,128], index: 4, kind: input, shape index: {}]
  %s5 = inlined_call_operand.vmem [shape: bf16[128,128], index: 5, kind: input, shape index: {}]
  %s6 = inlined_call_operand.vmem [shape: f32[1,128], index: 6, kind: input, shape index: {}]
  %s7 = inlined_call_operand.vmem [shape: f32[16,128], index: 7, kind: output, shape index: {}]
  %s8 = sld [smem:[#allocation0]]
  $region46: #{_lambda_.1} parent=0
    _
  %s10 = ssub.s32 1, %s8
  %s11 = scalar_select 0, %s10, %s8
  $region1: #{_lambda_.1} parent=0
    #allocation2 [shape = 'u8[32768]{0}', space=vmem, size = 0x8000, scoped, tag = 'input window, operand 1, single buffered']
    #allocation3 [shape = 's32[1]{0}', space=sflag, size = 0x4, scoped, tag = 'scoped memory for _lambda_.1']
    #allocation4 [shape = 'u8[32768]{0}', space=vmem, size = 0x8000, scoped, tag = 'input window, operand 3, single buffered']
    #allocation5 [shape = 's32[1]{0}', space=sflag, size = 0x4, scoped, tag = 'scoped memory for _lambda_.1']
    %12 = vsyncpa [#allocation3], 0
    %13 = vsyncpa [#allocation5], 0
    // Predicated region
    $region2: #{_lambda_.1} parent=1 // pred_check
      _
    $region3: #{_lambda_.1} parent=1 // pred_check_branch
      %15 = sbr.rel (0) target = $region5
    $region4: #{_lambda_.1} parent=1 // pred_region
      _
    $region5: #{_lambda_.1} parent=1 // pred_fallthru
      _
    // Predicated region
    $region6: #{_lambda_.1} parent=1 // pred_check
      _
    $region7: #{_lambda_.1} parent=1 // pred_check_branch
      %17 = sbr.rel (0) target = $region9
    $region8: #{_lambda_.1} parent=1 // pred_region
      %s19 = ssub.s32 1024, 1024
      %20 = vsyncadd [#allocation3], %s19
      %s21 = sshll.u32 [#allocation2], 4
      %s22 = int_to_ptr.vmem [resolvable:$true] %s21
      %27 = dma.hbm_to_vmem [thread:$0]  %s1, 1024, %s22, [#allocation3], 64, 64, 4
    $region9: #{_lambda_.1} parent=1 // pred_fallthru
      _
    // Predicated region
    $region10: #{_lambda_.1} parent=1 // pred_check
      _
    $region11: #{_lambda_.1} parent=1 // pred_check_branch
      %29 = sbr.rel (0) target = $region13
    $region12: #{_lambda_.1} parent=1 // pred_region
      _
    $region13: #{_lambda_.1} parent=1 // pred_fallthru
      _
    // Predicated region
    $region14: #{_lambda_.1} parent=1 // pred_check
      _
    $region15: #{_lambda_.1} parent=1 // pred_check_branch
      %31 = sbr.rel (0) target = $region17
    $region16: #{_lambda_.1} parent=1 // pred_region
      %s33 = ssub.s32 1024, 1024
      %34 = vsyncadd [#allocation5], %s33
      %s35 = sshll.u32 [#allocation4], 4
      %s36 = int_to_ptr.vmem [resolvable:$true] %s35
      %41 = dma.hbm_to_vmem [thread:$0]  %s3, 1024, %s36, [#allocation5], 64, 64, 4
    $region17: #{_lambda_.1} parent=1 // pred_fallthru
      _
    // Predicated region
    $region18: #{_lambda_.1} parent=1 // pred_check
      _
    $region19: #{_lambda_.1} parent=1 // pred_check_branch
      %43 = sbr.rel (0) target = $region21
    $region20: #{_lambda_.1} parent=1 // pred_region
      _
    $region21: #{_lambda_.1} parent=1 // pred_fallthru
      _
    // Predicated region
    $region22: #{_lambda_.1} parent=1 // pred_check
      _
    $region23: #{_lambda_.1} parent=1 // pred_check_branch
      %45 = sbr.rel (0) target = $region25
    $region24: #{_lambda_.1} parent=1 // pred_region
      _
    $region25: #{_lambda_.1} parent=1 // pred_fallthru
      _
    // Predicated region
    $region26: #{_lambda_.1} parent=1 // pred_check
      _
    $region27: #{_lambda_.1} parent=1 // pred_check_branch
      %47 = sbr.rel (0) target = $region29
    $region28: #{_lambda_.1} parent=1 // pred_region
      _
    $region29: #{_lambda_.1} parent=1 // pred_fallthru
      _
    // Predicated region
    $region30: #{_lambda_.1} parent=1 // pred_check
      _
    $region31: #{_lambda_.1} parent=1 // pred_check_branch
      %49 = sbr.rel (0) target = $region33
    $region32: #{_lambda_.1} parent=1 // pred_region
      %50 = dma.done [#allocation3], 1024
    $region33: #{_lambda_.1} parent=1 // pred_fallthru
      _
    // Predicated region
    $region34: #{_lambda_.1} parent=1 // pred_check
      _
    $region35: #{_lambda_.1} parent=1 // pred_check_branch
      %52 = sbr.rel (0) target = $region37
    $region36: #{_lambda_.1} parent=1 // pred_region
      %53 = dma.done [#allocation5], 1024
    $region37: #{_lambda_.1} parent=1 // pred_fallthru
      _
    %v55 = vld [vmem:[%s0] sm:$0xf]
    %v56 = vld [vmem:[%s0 + $0x4] sm:$0xf]
    %v57 = vld [vmem:[#allocation2] sm:$0xf]
    %v58 = vld [vmem:[#allocation2 + $0x4] sm:$0xf]
    %v59 = vld [vmem:[#allocation2 + $0x8] sm:$0xf]
    %v60 = vld [vmem:[#allocation2 + $0xc] sm:$0xf]
    %v61 = vld [vmem:[#allocation2 + $0x10] sm:$0xf]
    %v62 = vld [vmem:[#allocation2 + $0x14] sm:$0xf]
    %v63 = vld [vmem:[#allocation2 + $0x18] sm:$0xf]
    %v64 = vld [vmem:[#allocation2 + $0x1c] sm:$0xf]
    %v65 = vld [vmem:[#allocation2 + $0x20] sm:$0xf]
    %v66 = vld [vmem:[#allocation2 + $0x24] sm:$0xf]
    %v67 = vld [vmem:[#allocation2 + $0x28] sm:$0xf]
    %v68 = vld [vmem:[#allocation2 + $0x2c] sm:$0xf]
    %v69 = vld [vmem:[#allocation2 + $0x30] sm:$0xf]
    %v70 = vld [vmem:[#allocation2 + $0x34] sm:$0xf]
    %v71 = vld [vmem:[#allocation2 + $0x38] sm:$0xf]
    %v72 = vld [vmem:[#allocation2 + $0x3c] sm:$0xf]
    %v73 = vld [vmem:[%s2] sm:$0x1]
    %v75 = vlaneseq
    %v76 = vshrl.u32 %v75, 7
    %v77 = vsub.s32 0, %v76
    %v78 = vrot.slane %v73, %v77
    %v82 = vunpack.c.l.b16 %v55
    %v83 = vunpack.c.l.b16 %v56
    %v84 = vpack.c.b16 %v83, %v82
    %v102 = vunpack.c.l.b16 %v57
    %v103 = vunpack.c.l.b16 %v58
    %v104 = vunpack.c.l.b16 %v59
    %v105 = vunpack.c.l.b16 %v60
    %v106 = vunpack.c.l.b16 %v61
    %v107 = vunpack.c.l.b16 %v62
    %v108 = vunpack.c.l.b16 %v63
    %v109 = vunpack.c.l.b16 %v64
    %v110 = vunpack.c.l.b16 %v65
    %v111 = vunpack.c.l.b16 %v66
    %v112 = vunpack.c.l.b16 %v67
    %v113 = vunpack.c.l.b16 %v68
    %v114 = vunpack.c.l.b16 %v69
    %v115 = vunpack.c.l.b16 %v70
    %v116 = vunpack.c.l.b16 %v71
    %v117 = vunpack.c.l.b16 %v72
    %v118 = vpack.c.b16 %v103, %v102
    %v119 = vpack.c.b16 %v105, %v104
    %v120 = vpack.c.b16 %v107, %v106
    %v121 = vpack.c.b16 %v109, %v108
    %v122 = vpack.c.b16 %v111, %v110
    %v123 = vpack.c.b16 %v113, %v112
    %v124 = vpack.c.b16 %v115, %v114
    %v125 = vpack.c.b16 %v117, %v116
    %134 = vmatprep.subr.bf16.mxu0 0
    %135 = vmatpush1.bf16.msra.mxu0 %v118
    %136 = vmatprep.subr.bf16.mxu0 0
    %137 = vmatpush1.bf16.msra.mxu0 %v119
    %138 = vmatprep.subr.bf16.mxu0 0
    %139 = vmatpush1.bf16.msra.mxu0 %v120
    %140 = vmatprep.subr.bf16.mxu0 0
    %141 = vmatpush1.bf16.msra.mxu0 %v121
    %142 = vmatprep.subr.bf16.mxu0 0
    %143 = vmatpush1.bf16.msra.mxu0 %v122
    %144 = vmatprep.subr.bf16.mxu0 0
    %145 = vmatpush1.bf16.msra.mxu0 %v123
    %146 = vmatprep.subr.bf16.mxu0 0
    %147 = vmatpush1.bf16.msra.mxu0 %v124
    %148 = vmatprep.subr.bf16.mxu0 0
    %149 = vmatpush1.bf16.msra.mxu0 %v125
    %150 = vmatprep.subr.bf16.mxu0 0
    %151 = vmatpush1.bf16.msra.mxu0 0
    %152 = vmatprep.subr.bf16.mxu0 0
    %153 = vmatpush1.bf16.msra.mxu0 0
    %154 = vmatprep.subr.bf16.mxu0 0
    %155 = vmatpush1.bf16.msra.mxu0 0
    %156 = vmatprep.subr.bf16.mxu0 0
    %157 = vmatpush1.bf16.msra.mxu0 0
    %158 = vmatprep.subr.bf16.mxu0 0
    %159 = vmatpush1.bf16.msra.mxu0 0
    %160 = vmatprep.subr.bf16.mxu0 0
    %161 = vmatpush1.bf16.msra.mxu0 0
    %162 = vmatprep.subr.bf16.mxu0 0
    %163 = vmatpush1.bf16.msra.mxu0 0
    %164 = vmatprep.subr.bf16.mxu0 0
    %165 = vmatpush1.bf16.msra.mxu0 0
    %166 = vmatprep.mubr.bf16.mxu0 0
    %167 = vmatmul.mubr.bf16.gmra.mrb[0].mxu0 %v84
    %v168 = vpop.f32.mrb[0].mxu0
    %v169 = vadd.f32 %v78, %v168
    %v170 = vpop.f32.mrb[0].mxu0
    %v171 = vpop.f32.mrb[0].mxu0
    %v172 = vadd.f32 %v78, %v171
    %v173 = vpop.f32.mrb[0].mxu0
    %174 = vdwg.mxu0
    %v175 = vmax.f32 %v169, 0.0
    %v176 = vmax.f32 %v172, 0.0
    %v177 = vpack.c.bf16 %v176, %v175
    %v178 = vld [vmem:[#allocation4] sm:$0xf]
    %v179 = vld [vmem:[#allocation4 + $0x4] sm:$0xf]
    %v180 = vld [vmem:[#allocation4 + $0x8] sm:$0xf]
    %v181 = vld [vmem:[#allocation4 + $0xc] sm:$0xf]
    %v182 = vld [vmem:[#allocation4 + $0x10] sm:$0xf]
    %v183 = vld [vmem:[#allocation4 + $0x14] sm:$0xf]
    %v184 = vld [vmem:[#allocation4 + $0x18] sm:$0xf]
    %v185 = vld [vmem:[#allocation4 + $0x1c] sm:$0xf]
    %v186 = vld [vmem:[#allocation4 + $0x20] sm:$0xf]
    %v187 = vld [vmem:[#allocation4 + $0x24] sm:$0xf]
    %v188 = vld [vmem:[#allocation4 + $0x28] sm:$0xf]
    %v189 = vld [vmem:[#allocation4 + $0x2c] sm:$0xf]
    %v190 = vld [vmem:[#allocation4 + $0x30] sm:$0xf]
    %v191 = vld [vmem:[#allocation4 + $0x34] sm:$0xf]
    %v192 = vld [vmem:[#allocation4 + $0x38] sm:$0xf]
    %v193 = vld [vmem:[#allocation4 + $0x3c] sm:$0xf]
    %v194 = vld [vmem:[%s4] sm:$0x1]
    %v196 = vlaneseq
    %v197 = vshrl.u32 %v196, 7
    %v198 = vsub.s32 0, %v197
    %v199 = vrot.slane %v194, %v198
    %v217 = vunpack.c.l.b16 %v178
    %v218 = vunpack.c.l.b16 %v179
    %v219 = vunpack.c.l.b16 %v180
    %v220 = vunpack.c.l.b16 %v181
    %v221 = vunpack.c.l.b16 %v182
    %v222 = vunpack.c.l.b16 %v183
    %v223 = vunpack.c.l.b16 %v184
    %v224 = vunpack.c.l.b16 %v185
    %v225 = vunpack.c.l.b16 %v186
    %v226 = vunpack.c.l.b16 %v187
    %v227 = vunpack.c.l.b16 %v188
    %v228 = vunpack.c.l.b16 %v189
    %v229 = vunpack.c.l.b16 %v190
    %v230 = vunpack.c.l.b16 %v191
    %v231 = vunpack.c.l.b16 %v192
    %v232 = vunpack.c.l.b16 %v193
    %v233 = vpack.c.b16 %v218, %v217
    %v234 = vpack.c.b16 %v220, %v219
    %v235 = vpack.c.b16 %v222, %v221
    %v236 = vpack.c.b16 %v224, %v223
    %v237 = vpack.c.b16 %v226, %v225
    %v238 = vpack.c.b16 %v228, %v227
    %v239 = vpack.c.b16 %v230, %v229
    %v240 = vpack.c.b16 %v232, %v231
    %249 = vmatprep.subr.bf16.mxu0 0
    %250 = vmatpush1.bf16.msra.mxu0 %v233
    %251 = vmatprep.subr.bf16.mxu0 0
    %252 = vmatpush1.bf16.msra.mxu0 %v234
    %253 = vmatprep.subr.bf16.mxu0 0
    %254 = vmatpush1.bf16.msra.mxu0 %v235
    %255 = vmatprep.subr.bf16.mxu0 0
    %256 = vmatpush1.bf16.msra.mxu0 %v236
    %257 = vmatprep.subr.bf16.mxu0 0
    %258 = vmatpush1.bf16.msra.mxu0 %v237
    %259 = vmatprep.subr.bf16.mxu0 0
    %260 = vmatpush1.bf16.msra.mxu0 %v238
    %261 = vmatprep.subr.bf16.mxu0 0
    %262 = vmatpush1.bf16.msra.mxu0 %v239
    %263 = vmatprep.subr.bf16.mxu0 0
    %264 = vmatpush1.bf16.msra.mxu0 %v240
    %265 = vmatprep.subr.bf16.mxu0 0
    %266 = vmatpush1.bf16.msra.mxu0 0
    %267 = vmatprep.subr.bf16.mxu0 0
    %268 = vmatpush1.bf16.msra.mxu0 0
    %269 = vmatprep.subr.bf16.mxu0 0
    %270 = vmatpush1.bf16.msra.mxu0 0
    %271 = vmatprep.subr.bf16.mxu0 0
    %272 = vmatpush1.bf16.msra.mxu0 0
    %273 = vmatprep.subr.bf16.mxu0 0
    %274 = vmatpush1.bf16.msra.mxu0 0
    %275 = vmatprep.subr.bf16.mxu0 0
    %276 = vmatpush1.bf16.msra.mxu0 0
    %277 = vmatprep.subr.bf16.mxu0 0
    %278 = vmatpush1.bf16.msra.mxu0 0
    %279 = vmatprep.subr.bf16.mxu0 0
    %280 = vmatpush1.bf16.msra.mxu0 0
    %281 = vmatprep.mubr.bf16.mxu0 0
    %282 = vmatmul.mubr.bf16.gmra.mrb[0].mxu0 %v177
    %v283 = vpop.f32.mrb[0].mxu0
    %v284 = vadd.f32 %v199, %v283
    %v285 = vpop.f32.mrb[0].mxu0
    %v286 = vpop.f32.mrb[0].mxu0
    %v287 = vadd.f32 %v199, %v286
    %v288 = vpop.f32.mrb[0].mxu0
    %289 = vdwg.mxu0
    %v290 = vmax.f32 %v284, 0.0
    %v291 = vmax.f32 %v287, 0.0
    %v292 = vpack.c.bf16 %v291, %v290
    %v293 = vld [vmem:[%s5] sm:$0xf]
    %v294 = vld [vmem:[%s5 + $0x4] sm:$0xf]
    %v295 = vld [vmem:[%s5 + $0x8] sm:$0xf]
    %v296 = vld [vmem:[%s5 + $0xc] sm:$0xf]
    %v297 = vld [vmem:[%s5 + $0x10] sm:$0xf]
    %v298 = vld [vmem:[%s5 + $0x14] sm:$0xf]
    %v299 = vld [vmem:[%s5 + $0x18] sm:$0xf]
    %v300 = vld [vmem:[%s5 + $0x1c] sm:$0xf]
    %v301 = vld [vmem:[%s5 + $0x20] sm:$0xf]
    %v302 = vld [vmem:[%s5 + $0x24] sm:$0xf]
    %v303 = vld [vmem:[%s5 + $0x28] sm:$0xf]
    %v304 = vld [vmem:[%s5 + $0x2c] sm:$0xf]
    %v305 = vld [vmem:[%s5 + $0x30] sm:$0xf]
    %v306 = vld [vmem:[%s5 + $0x34] sm:$0xf]
    %v307 = vld [vmem:[%s5 + $0x38] sm:$0xf]
    %v308 = vld [vmem:[%s5 + $0x3c] sm:$0xf]
    %v309 = vld [vmem:[%s6] sm:$0x1]
    %v311 = vlaneseq
    %v312 = vshrl.u32 %v311, 7
    %v313 = vsub.s32 0, %v312
    %v314 = vrot.slane %v309, %v313
    %v332 = vunpack.c.l.b16 %v293
    %v333 = vunpack.c.l.b16 %v294
    %v334 = vunpack.c.l.b16 %v295
    %v335 = vunpack.c.l.b16 %v296
    %v336 = vunpack.c.l.b16 %v297
    %v337 = vunpack.c.l.b16 %v298
    %v338 = vunpack.c.l.b16 %v299
    %v339 = vunpack.c.l.b16 %v300
    %v340 = vunpack.c.l.b16 %v301
    %v341 = vunpack.c.l.b16 %v302
    %v342 = vunpack.c.l.b16 %v303
    %v343 = vunpack.c.l.b16 %v304
    %v344 = vunpack.c.l.b16 %v305
    %v345 = vunpack.c.l.b16 %v306
    %v346 = vunpack.c.l.b16 %v307
    %v347 = vunpack.c.l.b16 %v308
    %v348 = vpack.c.b16 %v333, %v332
    %v349 = vpack.c.b16 %v335, %v334
    %v350 = vpack.c.b16 %v337, %v336
    %v351 = vpack.c.b16 %v339, %v338
    %v352 = vpack.c.b16 %v341, %v340
    %v353 = vpack.c.b16 %v343, %v342
    %v354 = vpack.c.b16 %v345, %v344
    %v355 = vpack.c.b16 %v347, %v346
    %364 = vmatprep.subr.bf16.mxu0 0
    %365 = vmatpush1.bf16.msra.mxu0 %v348
    %366 = vmatprep.subr.bf16.mxu0 0
    %367 = vmatpush1.bf16.msra.mxu0 %v349
    %368 = vmatprep.subr.bf16.mxu0 0
    %369 = vmatpush1.bf16.msra.mxu0 %v350
    %370 = vmatprep.subr.bf16.mxu0 0
    %371 = vmatpush1.bf16.msra.mxu0 %v351
    %372 = vmatprep.subr.bf16.mxu0 0
    %373 = vmatpush1.bf16.msra.mxu0 %v352
    %374 = vmatprep.subr.bf16.mxu0 0
    %375 = vmatpush1.bf16.msra.mxu0 %v353
    %376 = vmatprep.subr.bf16.mxu0 0
    %377 = vmatpush1.bf16.msra.mxu0 %v354
    %378 = vmatprep.subr.bf16.mxu0 0
    %379 = vmatpush1.bf16.msra.mxu0 %v355
    %380 = vmatprep.subr.bf16.mxu0 0
    %381 = vmatpush1.bf16.msra.mxu0 0
    %382 = vmatprep.subr.bf16.mxu0 0
    %383 = vmatpush1.bf16.msra.mxu0 0
    %384 = vmatprep.subr.bf16.mxu0 0
    %385 = vmatpush1.bf16.msra.mxu0 0
    %386 = vmatprep.subr.bf16.mxu0 0
    %387 = vmatpush1.bf16.msra.mxu0 0
    %388 = vmatprep.subr.bf16.mxu0 0
    %389 = vmatpush1.bf16.msra.mxu0 0
    %390 = vmatprep.subr.bf16.mxu0 0
    %391 = vmatpush1.bf16.msra.mxu0 0
    %392 = vmatprep.subr.bf16.mxu0 0
    %393 = vmatpush1.bf16.msra.mxu0 0
    %394 = vmatprep.subr.bf16.mxu0 0
    %395 = vmatpush1.bf16.msra.mxu0 0
    %396 = vmatprep.mubr.bf16.mxu0 0
    %397 = vmatmul.mubr.bf16.gmra.mrb[0].mxu0 %v292
    %v398 = vpop.f32.mrb[0].mxu0
    %v399 = vadd.f32 %v314, %v398
    %v400 = vpop.f32.mrb[0].mxu0
    %v401 = vpop.f32.mrb[0].mxu0
    %v402 = vadd.f32 %v314, %v401
    %v403 = vpop.f32.mrb[0].mxu0
    %404 = vdwg.mxu0
    %405 = vst [vmem:[%s7] sm:$0xff] %v399
    %406 = vst [vmem:[%s7 + $0x8] sm:$0xff] %v402
    // Predicated region
    $region38: #{_lambda_.1} parent=1 // pred_check
      _
    $region39: #{_lambda_.1} parent=1 // pred_check_branch
      %408 = sbr.rel (0) target = $region41
    $region40: #{_lambda_.1} parent=1 // pred_region
      _
    $region41: #{_lambda_.1} parent=1 // pred_fallthru
      _
    // Predicated region
    $region42: #{_lambda_.1} parent=1 // pred_check
      _
    $region43: #{_lambda_.1} parent=1 // pred_check_branch
      %410 = sbr.rel (0) target = $region45
    $region44: #{_lambda_.1} parent=1 // pred_region
      _
    $region45: #{_lambda_.1} parent=1 // pred_fallthru
      _
    %411 = vsyncpa [#allocation3], 1
    %412 = vsyncpa [#allocation5], 1

</llo_original>
